<compile_context>
chip_gen: v7x
topology: tpu7x:2x2x1
jax: 0.10.0
libtpu: 0.0.40
codegen_flags: <defaults>
</compile_context>

<pallas_src>
import jax
import jax.numpy as jnp
from jax.experimental import pallas as pl
from jax.experimental.pallas import tpu as pltpu


def make_positional_encoding(max_len: int, n_dim: int,
                             dtype=jnp.float32) -> jnp.ndarray:
    """Deterministic sinusoidal PE buffer, matching the PyTorch __init__."""
    assert n_dim % 2 == 0, "n_dim must be even (matches the PyTorch module)"
    position = jnp.arange(max_len, dtype=jnp.float32)[:, None]           # (max_len, 1)
    div_term = jnp.exp(
        jnp.arange(0, n_dim, 2, dtype=jnp.float32)
        * (-jnp.log(jnp.float32(10000.0)) / n_dim)
    )                                                                     # (n_dim/2,)
    pe = jnp.zeros((max_len, n_dim), dtype=jnp.float32)
    pe = pe.at[:, 0::2].set(jnp.sin(position * div_term))
    pe = pe.at[:, 1::2].set(jnp.cos(position * div_term))
    return pe.astype(dtype)


def _add_pe_kernel(x_ref, pe_ref, o_ref):
    # x_ref / o_ref: (B, C) lane-dense tile; pe_ref: (1, C) shared across batch.
    # (1, C) + (B, C) is a cheap sublane broadcast on the VPU.
    o_ref[...] = x_ref[...] + pe_ref[...]


def _pick_chunk(flat_len: int, batch: int, dtype_bytes: int,
                target_block_bytes: int = 2 * 1024 * 1024) -> int:
    """Largest divisor of flat_len that is a multiple of 128 and keeps the
    per-step x block (batch * chunk * dtype_bytes) near the target size."""
    assert flat_len % 128 == 0
    max_elems = max(128, target_block_bytes // max(1, batch * dtype_bytes))
    c = (min(flat_len, max_elems) // 128) * 128
    c = max(c, 128)
    while flat_len % c != 0:          # terminates: 128 divides flat_len
        c -= 128
    return c


def positional_encoding_forward(x: jnp.ndarray, pe: jnp.ndarray) -> jnp.ndarray:
    """x: (B, S, D); pe: (max_len, D). Returns x + pe[:S][None] in x.dtype."""
    B, S, D = x.shape
    max_len = pe.shape[0]
    flat = S * D
    dtype_bytes = jnp.dtype(x.dtype).itemsize

    # Lane-dense flat layout: (B, S, D) -> (B, S*D); row-major reshape is free.
    x_flat = x.reshape(B, flat)
    pe = pe.astype(x.dtype)

    if flat % 128 == 0:
        # Fast path: tile the flattened axis; use the FULL pe buffer flattened
        # (no pe[:S] HBM copy) -- chunk c reads pe_flat[c*C:(c+1)*C] <= S*D.
        chunk = _pick_chunk(flat, B, dtype_bytes)
        pe_in = pe.reshape(1, max_len * D)
    else:
        # Fallback: one full block; slice pe so block shape == full array dims.
        chunk = flat
        pe_in = pe[:S].reshape(1, flat)
    num_chunks = flat // chunk

    out_flat = pl.pallas_call(
        _add_pe_kernel,
        out_shape=jax.ShapeDtypeStruct((B, flat), x.dtype),
        grid=(num_chunks,),
        in_specs=[
            pl.BlockSpec((B, chunk), lambda c: (0, c)),   # x tile (full batch)
            pl.BlockSpec((1, chunk), lambda c: (0, c)),   # pe chunk, shared over B
        ],
        out_specs=pl.BlockSpec((B, chunk), lambda c: (0, c)),
        compiler_params=pltpu.CompilerParams(
            dimension_semantics=("parallel",),            # 2x TCs on v7x
        ),
    )(x_flat, pe_in)

    return out_flat.reshape(B, S, D)


if __name__ == "__main__":
    # Small shapes consistent with the module: batch=2, seq=8, n_dim=64.
    B, S, D = 2, 8, 64
    max_len = 16

    key = jax.random.PRNGKey(0)
    x = jax.random.normal(key, (B, S, D), dtype=jnp.float32)

    pe = make_positional_encoding(max_len, D)

    out = positional_encoding_forward(x, pe)
    out = jax.block_until_ready(out)

    # Reference check in plain JAX (same math as the PyTorch forward).
    ref = x + pe[:S][None, :, :]
    assert out.shape == (B, S, D)
    assert jnp.allclose(out, ref, atol=1e-6), "mismatch vs reference"

    # TODO(synk): nn.Dropout exists in __init__ but is never applied in
    # forward(), so it is intentionally not implemented here.
    print("KERNEL_OK")
</pallas_src>

<mosaic_0001>
module attributes {stable_mosaic.version = 11 : i64} {
  func.func @_add_pe_kernel(%arg0: i32, %arg1: memref<2x512xf32, #tpu.memory_space<vmem>>, %arg2: memref<1x512xf32, #tpu.memory_space<vmem>>, %arg3: memref<2x512xf32, #tpu.memory_space<vmem>>) attributes {dimension_semantics = [#tpu.dimension_semantics<parallel>], iteration_bounds = array<i64: 1>, scalar_prefetch = 0 : i64, scratch_operands = 0 : i64, tpu.core_type = #tpu.core_type<tc>, window_params = [{transform_indices = @transform_0, window_bounds = array<i64: 2, 512>}, {transform_indices = @transform_1, window_bounds = array<i64: 1, 512>}, {transform_indices = @transform_2, window_bounds = array<i64: 2, 512>}]} {
    %c0 = arith.constant 0 : index
    %c0_0 = arith.constant 0 : index
    %0 = vector.load %arg1[%c0, %c0_0] : memref<2x512xf32, #tpu.memory_space<vmem>>, vector<2x512xf32>
    %c0_1 = arith.constant 0 : index
    %c0_2 = arith.constant 0 : index
    %1 = vector.load %arg2[%c0_1, %c0_2] : memref<1x512xf32, #tpu.memory_space<vmem>>, vector<1x512xf32>
    %2 = vector.broadcast %1 : vector<1x512xf32> to vector<2x512xf32>
    %3 = arith.addf %0, %2 : vector<2x512xf32>
    %c0_3 = arith.constant 0 : index
    %c0_4 = arith.constant 0 : index
    %4 = vector.load %arg3[%c0_3, %c0_4] : memref<2x512xf32, #tpu.memory_space<vmem>>, vector<2x512xf32>
    tpu.vector_store %arg3[%c0_3, %c0_4], %3 {strides = array<i32>} : memref<2x512xf32, #tpu.memory_space<vmem>>, vector<2x512xf32>,
    return
  }
  func.func @transform_0(%arg0: i32) -> (i32, i32) {
    %c0_i32 = arith.constant 0 : i32
    %c0_i32_0 = arith.constant 0 : i32
    return %c0_i32, %arg0 : i32, i32
  }
  func.func @transform_1(%arg0: i32) -> (i32, i32) {
    %c0_i32 = arith.constant 0 : i32
    %c0_i32_0 = arith.constant 0 : i32
    return %c0_i32, %arg0 : i32, i32
  }
  func.func @transform_2(%arg0: i32) -> (i32, i32) {
    %c0_i32 = arith.constant 0 : i32
    %c0_i32_0 = arith.constant 0 : i32
    return %c0_i32, %arg0 : i32, i32
  }
}

</mosaic_0001>

<llo_original>
// kernel: tpu_custom_call.1
$region0: #{tpu_custom_call.1}
  #allocation0 [shape = 'u32[]', space=smem, size = 0x4, offset = 0x4, fixed_abs, tag = 'smem constant byte address 0x4 - core index']
  #allocation1 [shape = 'u32[144,128]{1,0:T(1,128)}', space=vmem, size = 0x12000, scoped, tag = 'internal scratch']
  %s0 = inlined_call_operand.hbm [shape: f32[2,512], index: 0, kind: input, shape index: {}]
  %s1 = inlined_call_operand.hbm [shape: f32[1,1024], index: 1, kind: input, shape index: {}]
  %s2 = inlined_call_operand.hbm [shape: f32[2,512], index: 2, kind: output, shape index: {}]
  %s3 = sld [smem:[#allocation0]]
  $region26: #{tpu_custom_call.1} parent=0
    _
  %s5 = ssub.s32 1, %s3
  %s6 = scalar_select 0, %s5, %s3
  $region1: #{tpu_custom_call.1} parent=0
    #allocation2 [shape = 'u8[4096]{0}', space=vmem, size = 0x1000, scoped, tag = 'input window, operand 0, single buffered']
    #allocation3 [shape = 's32[1]{0}', space=sflag, size = 0x4, scoped, tag = 'scoped memory for tpu_custom_call.1']
    #allocation4 [shape = 's32[1]{0}', space=sflag, size = 0x4, scoped, tag = 'scoped memory for tpu_custom_call.1']
    #allocation5 [shape = 'u8[2048]{0}', space=vmem, size = 0x800, scoped, tag = 'input window, operand 1, single buffered']
    #allocation6 [shape = 's32[1]{0}', space=sflag, size = 0x4, scoped, tag = 'scoped memory for tpu_custom_call.1']
    #allocation7 [shape = 'u8[4096]{0}', space=vmem, size = 0x1000, scoped, tag = 'output window, operand 0, single buffered']
    %7 = vsyncpa [#allocation3], 0
    %8 = vsyncpa [#allocation6], 0
    %9 = vsyncpa [#allocation4], 0
    // Predicated region
    $region2: #{tpu_custom_call.1} parent=1 // pred_check
      _
    $region3: #{tpu_custom_call.1} parent=1 // pred_check_branch
      %11 = sbr.rel (0) target = $region5
    $region4: #{tpu_custom_call.1} parent=1 // pred_region
      %s13 = ssub.s32 128, 128
      %14 = vsyncadd [#allocation3], %s13
      %s16 = sshll.u32 [#allocation2], 4
      %s17 = int_to_ptr.vmem [resolvable:$true] %s16
      %19 = dma.hbm_to_vmem [thread:$0]  %s0, 128, %s17, [#allocation3]
    $region5: #{tpu_custom_call.1} parent=1 // pred_fallthru
      _
    // Predicated region
    $region6: #{tpu_custom_call.1} parent=1 // pred_check
      _
    $region7: #{tpu_custom_call.1} parent=1 // pred_check_branch
      %21 = sbr.rel (0) target = $region9
    $region8: #{tpu_custom_call.1} parent=1 // pred_region
      %s23 = ssub.s32 64, 64
      %24 = vsyncadd [#allocation6], %s23
      %s26 = sshll.u32 [#allocation5], 4
      %s27 = int_to_ptr.vmem [resolvable:$true] %s26
      %29 = dma.hbm_to_vmem [thread:$0]  %s1, 64, %s27, [#allocation6]
    $region9: #{tpu_custom_call.1} parent=1 // pred_fallthru
      _
    // Predicated region
    $region10: #{tpu_custom_call.1} parent=1 // pred_check
      _
    $region11: #{tpu_custom_call.1} parent=1 // pred_check_branch
      %31 = sbr.rel (0) target = $region13
    $region12: #{tpu_custom_call.1} parent=1 // pred_region
      %32 = dma.done [#allocation3], 128
    $region13: #{tpu_custom_call.1} parent=1 // pred_fallthru
      _
    // Predicated region
    $region14: #{tpu_custom_call.1} parent=1 // pred_check
      _
    $region15: #{tpu_custom_call.1} parent=1 // pred_check_branch
      %34 = sbr.rel (0) target = $region17
    $region16: #{tpu_custom_call.1} parent=1 // pred_region
      %35 = dma.done [#allocation6], 64
    $region17: #{tpu_custom_call.1} parent=1 // pred_fallthru
      _
    %v36 = vld [vmem:[#allocation2] sm:$0xff]
    %v37 = vld [vmem:[#allocation5] sm:$0xf]
    %v39 = vlaneseq
    %v40 = vshrl.u32 %v39, 7
    %v41 = vsub.s32 0, %v40
    %v42 = vrot.slane %v37, %v41
    %v43 = vlaneseq
    %v44 = vshrl.u32 %v43, 7
    %v45 = vsub.s32 1, %v44
    %v46 = vrot.slane %v37, %v45
    %v47 = vlaneseq
    %v48 = vshrl.u32 %v47, 7
    %v49 = vsub.s32 2, %v48
    %v50 = vrot.slane %v37, %v49
    %v51 = vlaneseq
    %v52 = vshrl.u32 %v51, 7
    %v53 = vsub.s32 3, %v52
    %v54 = vrot.slane %v37, %v53
    %v55 = vcombine.low %v42, %v46
    %v56 = vcombine.low %v50, %v54
    %v58 = vunpack.c.l.s4 1983009808
    %v59 = vunpack.c.0.s8 %v58
    %v60 = vlaneseq
    %v61 = vshrl.u32 %v60, 7
    %v62 = vsub.s32 %v59, %v61
    %v63 = vrot.slane %v55, %v62
    %v65 = vunpack.c.l.s4 1983009808
    %v66 = vunpack.c.0.s8 %v65
    %v67 = vlaneseq
    %v68 = vshrl.u32 %v67, 7
    %v69 = vsub.s32 %v66, %v68
    %v70 = vrot.slane %v56, %v69
    %v71 = vcombine.low %v63, %v70
    %v73 = vadd.f32 %v36, %v71
    %74 = vst [vmem:[#allocation7] sm:$0xff] %v73
    // Predicated region
    $region18: #{tpu_custom_call.1} parent=1 // pred_check
      _
    $region19: #{tpu_custom_call.1} parent=1 // pred_check_branch
      %76 = sbr.rel (0) target = $region21
    $region20: #{tpu_custom_call.1} parent=1 // pred_region
      %s78 = ssub.s32 128, 128
      %79 = vsyncadd [#allocation4], %s78
      %s81 = sshll.u32 [#allocation7], 4
      %s82 = int_to_ptr.vmem [resolvable:$true] %s81
      %84 = dma.vmem_to_hbm [thread:$0]  %s82, 128, %s2, [#allocation4]
    $region21: #{tpu_custom_call.1} parent=1 // pred_fallthru
      _
    // Predicated region
    $region22: #{tpu_custom_call.1} parent=1 // pred_check
      _
    $region23: #{tpu_custom_call.1} parent=1 // pred_check_branch
      %86 = sbr.rel (0) target = $region25
    $region24: #{tpu_custom_call.1} parent=1 // pred_region
      %87 = dma.done [#allocation4], 128
    $region25: #{tpu_custom_call.1} parent=1 // pred_fallthru
      _
    %88 = vsyncpa [#allocation3], 1
    %89 = vsyncpa [#allocation6], 1
    %90 = vsyncpa [#allocation4], 1

</llo_original>
